<compile_context>
chip_gen: v7x
topology: tpu7x:2x2x1
jax: 0.10.0
libtpu: 0.0.40
codegen_flags: <defaults>
</compile_context>

<pallas_src>
import math

import jax
import jax.numpy as jnp
from jax.experimental import pallas as pl
from jax.experimental.pallas import tpu as pltpu


# ----------------------------------------------------------------------------
# Pallas kernel
# ----------------------------------------------------------------------------
def _make_mlp_kernel(num_layers: int, activation: str, compute_dtype,
                     hidden_gelu_approx: bool):
    """Fused MLP + positivity-activation kernel for `num_layers` Linear layers."""

    def _final_act(h):  # h is f32
        if activation == "elu+1":
            # elu(h)+1 == where(h>0, h+1, exp(h))  (alpha=1); exact and positive.
            return jnp.where(h > 0.0, h + 1.0, jnp.exp(h))
        elif activation == "relu":
            return jnp.maximum(h, 0.0)
        elif activation == "softplus":
            return jax.nn.softplus(h)
        elif activation == "gelu":
            return jax.nn.gelu(h, approximate=False)
        else:
            raise ValueError(activation)

    def kernel(x_ref, *refs):
        # refs = (w0, b0, w1, b1, ..., out)
        o_ref = refs[-1]
        h = x_ref[...]                                   # (tm_w, k*in_dim), input dtype
        for i in range(num_layers):
            w = refs[2 * i][...]                         # (k*d_in, k*d_out), bf16
            b = refs[2 * i + 1][...]                     # (1, k*d_out), f32
            h = jnp.dot(h.astype(compute_dtype), w,
                        preferred_element_type=jnp.float32) + b
            if i < num_layers - 1:
                # TODO(synk): approximate=True deviates from nn.GELU() exact erf
                # (perf: tanh goes to the EUP slot); set hidden_gelu_approx=False
                # for strict parity.
                h = jax.nn.gelu(h, approximate=hidden_gelu_approx)
        o_ref[...] = _final_act(h).astype(o_ref.dtype)

    return kernel


# ----------------------------------------------------------------------------
# One-time parameter packing (hoisted out of the per-call wrapper)
# ----------------------------------------------------------------------------
def pack_positive_map_params(weights, biases, compute_dtype=jnp.bfloat16):
    """
    weights: list of (d_in_i, d_out_i) arrays (transposed vs. nn.Linear.weight)
    biases:  list of (d_out_i,) arrays
    Returns a dict with the lane-packed, dtype-cast parameters + static metadata.
    """
    num_layers = len(weights)
    in_dim = int(weights[0].shape[0])
    feature_dim = int(weights[-1].shape[1])

    # --- lane-packing factor: output block last dim must be a multiple of 128.
    if feature_dim % 128 == 0:
        k, feat_pad = 1, feature_dim
    else:
        k = 128 // math.gcd(feature_dim, 128)
        if k <= 8:
            feat_pad = feature_dim
        else:
            # Awkward feature_dim: keep k small and zero-pad the last layer's
            # columns so k*feat_pad is a multiple of 128 (never a <128-lane store).
            k = 8
            q = 128 // math.gcd(k, 128)                 # = 16
            feat_pad = pl.cdiv(feature_dim, q) * q

    params, dims = [], [in_dim]
    for li, (w, b) in enumerate(zip(weights, biases)):
        d_in, d_out = int(w.shape[0]), int(w.shape[1])
        if li == num_layers - 1 and feat_pad != d_out:
            w = jnp.pad(w, ((0, 0), (0, feat_pad - d_out)))
            b = jnp.pad(b, (0, feat_pad - d_out))
            d_out = feat_pad
        if k > 1:
            w_k = jnp.kron(jnp.eye(k, dtype=w.dtype), w)   # block-diag (k*d_in, k*d_out)
            b_k = jnp.tile(b.reshape(1, d_out), (1, k))    # (1, k*d_out)
        else:
            w_k = w
            b_k = b.reshape(1, d_out)
        params.append(jnp.asarray(w_k, compute_dtype))     # bf16 operands for the MXU
        params.append(jnp.asarray(b_k, jnp.float32))       # f32 add after accumulation
        dims.append(d_out)

    return dict(params=tuple(params), k=k, in_dim=in_dim,
                feature_dim=feature_dim, feature_dim_padded=feat_pad,
                dims=tuple(dims), num_layers=num_layers,
                compute_dtype=compute_dtype)


# ----------------------------------------------------------------------------
# Forward wrapper
# ----------------------------------------------------------------------------
def learnable_positive_map_forward(x, packed, activation="elu+1",
                                   hidden_gelu_approx=True,
                                   out_dtype=None,
                                   target_bytes_per_step=2 * 1024 * 1024,
                                   vmem_budget_bytes=24 * 1024 * 1024):
    """
    x:      (..., in_dim)
    packed: output of pack_positive_map_params (pack once, reuse per call)
    returns (..., feature_dim) in out_dtype (default: x.dtype; bf16 saves ~33% HBM).
    """
    k = packed["k"]
    in_dim = packed["in_dim"]
    feature_dim = packed["feature_dim"]
    feat_pad = packed["feature_dim_padded"]
    dims = packed["dims"]
    num_layers = packed["num_layers"]
    compute_dtype = packed["compute_dtype"]
    params = packed["params"]
    out_dtype = x.dtype if out_dtype is None else jnp.dtype(out_dtype)
    assert x.shape[-1] == in_dim

    lead_shape = x.shape[:-1]
    M = int(math.prod(lead_shape)) if lead_shape else 1
    x2d = x.reshape(M, in_dim)

    rows_q = 8 * k                                  # row quantum of the packed view
    M_pad = pl.cdiv(M, rows_q) * rows_q
    if M_pad != M:
        # Only pads to the next multiple of 8*k (<= 63 extra rows); skipped
        # entirely for aligned M.
        # TODO(synk): for large ragged M, avoid this full copy by passing the
        # valid row count via scalar prefetch and masking the tail tile in-kernel.
        x2d = jnp.pad(x2d, ((0, M_pad - M), (0, 0)))

    x_isz = jnp.dtype(x.dtype).itemsize
    o_isz = jnp.dtype(out_dtype).itemsize

    # --- tile sizing: stream ~target_bytes_per_step of HBM traffic per grid step
    # (amortizes the ~0.35 us per-step overhead), clamped by a VMEM budget and
    # by ">= 2 grid steps" (v7x megacore shards the single 'parallel' axis).
    bytes_per_row_hbm = in_dim * x_isz + feat_pad * o_isz
    vmem_per_row = 2 * in_dim * x_isz + 2 * feat_pad * o_isz    # double-buffered I/O
    vmem_per_row += 2 * in_dim                                  # bf16 cast of input
    for d in dims[1:]:
        vmem_per_row += 4 * d + 2 * d                           # f32 layer out + bf16 recast

    tile_rows = max(rows_q, target_bytes_per_step // bytes_per_row_hbm)
    tile_rows = min(tile_rows, max(rows_q, vmem_budget_bytes // vmem_per_row))
    tile_rows = min(tile_rows, M_pad)
    if M_pad >= 2 * rows_q:
        tile_rows = min(tile_rows, pl.cdiv(M_pad, 2))
    tile_rows = max(rows_q, (int(tile_rows) // rows_q) * rows_q)

    Mw = M_pad // k
    tm_w = tile_rows // k
    grid = (pl.cdiv(Mw, tm_w),)                     # ragged final block is masked by Pallas
    xw = x2d.reshape(Mw, k * in_dim)                # contiguous row-major -> free reshape

    kernel = _make_mlp_kernel(num_layers, activation, compute_dtype,
                              hidden_gelu_approx)

    in_specs = [pl.BlockSpec((tm_w, k * in_dim), lambda i: (i, 0))]
    for li in range(num_layers):
        d_in, d_out = dims[li], dims[li + 1]
        in_specs.append(pl.BlockSpec((k * d_in, k * d_out), lambda i: (0, 0)))
        in_specs.append(pl.BlockSpec((1, k * d_out), lambda i: (0, 0)))
    out_specs = pl.BlockSpec((tm_w, k * feat_pad), lambda i: (i, 0))

    # --- VMEM limit: explicit (v5e default is 16 MiB), with 2x headroom over the
    # estimate, capped at 48 MiB to stay safe on v7x's 64 MiB physical VMEM.
    param_bytes = sum(int(p.size) * jnp.dtype(p.dtype).itemsize for p in params)
    est_vmem = tile_rows * vmem_per_row + 2 * param_bytes
    vmem_limit = int(min(48 << 20, max(32 << 20, 2 * est_vmem)))

    # --- advisory cost estimate for XLA scheduling around the custom call.
    macs = sum(k * a * b for a, b in zip(dims[:-1], dims[1:]))   # incl. block-diag zeros
    cost = pl.CostEstimate(
        flops=2 * M_pad * macs // max(k, 1) * k // k * k if False else 2 * (M_pad // k) * macs,
        transcendentals=M_pad * (sum(dims[1:-1]) + feat_pad),
        bytes_accessed=M_pad * bytes_per_row_hbm + param_bytes,
    )

    out_w = pl.pallas_call(
        kernel,
        out_shape=jax.ShapeDtypeStruct((Mw, k * feat_pad), out_dtype),
        grid_spec=pltpu.PrefetchScalarGridSpec(
            num_scalar_prefetch=0,
            grid=grid,
            in_specs=in_specs,
            out_specs=out_specs,
        ),
        compiler_params=pltpu.CompilerParams(
            dimension_semantics=("parallel",),
            vmem_limit_bytes=vmem_limit),
        cost_estimate=cost,
    )(xw, *params)

    out = out_w.reshape(M_pad, feat_pad)            # free reshape (contiguous)
    if M_pad != M:
        out = out[:M]
    if feat_pad != feature_dim:
        out = out[:, :feature_dim]                  # drop zero-padded columns
    return out.reshape(*lead_shape, feature_dim)


# ----------------------------------------------------------------------------
# Deterministic parameter init (mirrors the PyTorch module's __init__)
# ----------------------------------------------------------------------------
def init_learnable_positive_map(key, in_dim, feature_dim, hidden_dim=None,
                                num_layers=1, use_bias=True, dtype=jnp.float32):
    _hidden = hidden_dim if hidden_dim is not None else max(in_dim, feature_dim)
    weights, biases = [], []
    cur = in_dim
    for i in range(num_layers):
        is_last = i == num_layers - 1
        out = feature_dim if is_last else _hidden
        key, kw, kb = jax.random.split(key, 3)
        # kaiming_uniform_(a=sqrt(5)) on (out, in) weight -> bound = 1/sqrt(fan_in)
        bound = 1.0 / math.sqrt(cur)
        w = jax.random.uniform(kw, (cur, out), dtype, minval=-bound, maxval=bound)
        if use_bias:
            b = jax.random.uniform(kb, (out,), dtype, minval=-bound, maxval=bound)
        else:
            b = jnp.zeros((out,), dtype)
        weights.append(w)
        biases.append(b)
        cur = out
    return weights, biases


# ----------------------------------------------------------------------------
# Pure-JAX references for correctness
# ----------------------------------------------------------------------------
def _apply_final_act(h, activation):
    if activation == "elu+1":
        return jnp.where(h > 0.0, h + 1.0, jnp.exp(h))
    elif activation == "relu":
        return jnp.maximum(h, 0.0)
    elif activation == "softplus":
        return jax.nn.softplus(h)
    elif activation == "gelu":
        return jax.nn.gelu(h, approximate=False)
    raise ValueError(activation)


def reference_forward(x, weights, biases, activation="elu+1",
                      compute_dtype=None, hidden_gelu_approx=False):
    """compute_dtype=None -> pure f32; compute_dtype=bf16 mimics kernel precision."""
    h = x.astype(jnp.float32)
    n = len(weights)
    for i, (w, b) in enumerate(zip(weights, biases)):
        if compute_dtype is not None:
            h = jnp.dot(h.astype(compute_dtype), w.astype(compute_dtype),
                        preferred_element_type=jnp.float32)
        else:
            h = jnp.dot(h, w.astype(jnp.float32),
                        preferred_element_type=jnp.float32)
        h = h + b.astype(jnp.float32)
        if i < n - 1:
            h = jax.nn.gelu(h, approximate=hidden_gelu_approx)
    return _apply_final_act(h, activation).astype(x.dtype)


if __name__ == "__main__":
    key = jax.random.PRNGKey(0)
    k_x, k_p = jax.random.split(key)

    # Small shapes consistent with the module: x is (batch, seq, in_dim).
    batch, seq, in_dim, feature_dim, hidden_dim = 2, 8, 16, 32, 32
    num_layers = 2            # Linear -> GELU -> Linear -> (elu+1)
    activation = "elu+1"

    x = jax.random.normal(k_x, (batch, seq, in_dim), dtype=jnp.float32)
    weights, biases = init_learnable_positive_map(
        k_p, in_dim, feature_dim, hidden_dim=hidden_dim,
        num_layers=num_layers, use_bias=True, dtype=jnp.float32)

    # Pack parameters once (kron replication + dtype casts hoisted out of forward).
    packed = pack_positive_map_params(weights, biases)

    phi = learnable_positive_map_forward(x, packed, activation=activation)
    phi = jax.block_until_ready(phi)
    assert phi.shape == (batch, seq, feature_dim), phi.shape

    # Tight check against a reference using the exact same numerics as the kernel
    # (bf16 operands / f32 accumulation, tanh-approx hidden GELU).
    ref_same = reference_forward(x, weights, biases, activation=activation,
                                 compute_dtype=jnp.bfloat16,
                                 hidden_gelu_approx=True)
    assert jnp.allclose(phi, ref_same, atol=1e-4, rtol=1e-4), \
        float(jnp.max(jnp.abs(phi - ref_same)))

    # Loose sanity check against full-f32, exact-erf-GELU PyTorch-equivalent math
    # (difference: bf16 operand rounding + tanh-vs-erf hidden GELU).
    ref_f32 = reference_forward(x, weights, biases, activation=activation,
                                compute_dtype=None, hidden_gelu_approx=False)
    assert jnp.allclose(phi, ref_f32, atol=6e-2, rtol=6e-2), \
        float(jnp.max(jnp.abs(phi - ref_f32)))

    # Positivity of elu+1.
    assert bool(jnp.all(phi > 0.0))

    print("KERNEL_OK")
</pallas_src>

<mosaic_0001>
module attributes {stable_mosaic.version = 11 : i64} {
  func.func @kernel(%arg0: i32, %arg1: memref<8x64xf32, #tpu.memory_space<vmem>>, %arg2: memref<64x128xbf16, #tpu.memory_space<vmem>>, %arg3: memref<1x128xf32, #tpu.memory_space<vmem>>, %arg4: memref<128x128xbf16, #tpu.memory_space<vmem>>, %arg5: memref<1x128xf32, #tpu.memory_space<vmem>>, %arg6: memref<8x128xf32, #tpu.memory_space<vmem>>) attributes {dimension_semantics = [#tpu.dimension_semantics<parallel>], iteration_bounds = array<i64: 1>, scalar_prefetch = 0 : i64, scratch_operands = 0 : i64, tpu.core_type = #tpu.core_type<tc>, window_params = [{transform_indices = @transform_0, window_bounds = array<i64: 8, 64>}, {pipeline_mode = #tpu.pipeline_mode<synchronous>, transform_indices = @transform_1, window_bounds = array<i64: 64, 128>}, {pipeline_mode = #tpu.pipeline_mode<synchronous>, transform_indices = @transform_2, window_bounds = array<i64: 1, 128>}, {pipeline_mode = #tpu.pipeline_mode<synchronous>, transform_indices = @transform_3, window_bounds = array<i64: 128, 128>}, {pipeline_mode = #tpu.pipeline_mode<synchronous>, transform_indices = @transform_4, window_bounds = array<i64: 1, 128>}, {transform_indices = @transform_5, window_bounds = array<i64: 8, 128>}]} {
    %c0 = arith.constant 0 : index
    %c0_0 = arith.constant 0 : index
    %0 = vector.load %arg1[%c0, %c0_0] : memref<8x64xf32, #tpu.memory_space<vmem>>, vector<8x64xf32>
    %c0_1 = arith.constant 0 : index
    %c0_2 = arith.constant 0 : index
    %1 = vector.load %arg2[%c0_1, %c0_2] : memref<64x128xbf16, #tpu.memory_space<vmem>>, vector<64x128xbf16>
    %c0_3 = arith.constant 0 : index
    %c0_4 = arith.constant 0 : index
    %2 = vector.load %arg3[%c0_3, %c0_4] : memref<1x128xf32, #tpu.memory_space<vmem>>, vector<1x128xf32>
    %3 = arith.truncf %0 : vector<8x64xf32> to vector<8x64xbf16>
    %cst = arith.constant dense<0.000000e+00> : vector<8x128xf32>
    %4 = tpu.matmul %3, %1, %cst {dimension_numbers = #tpu.dot_dimension_numbers<[1], [0], [0], [1], [0, 0, 1, 1], [], []>} : vector<8x64xbf16>, vector<64x128xbf16>, vector<8x128xf32> -> vector<8x128xf32>
    %5 = vector.broadcast %2 : vector<1x128xf32> to vector<8x128xf32>
    %6 = arith.addf %4, %5 : vector<8x128xf32>
    %7 = arith.mulf %6, %6 : vector<8x128xf32>
    %8 = arith.mulf %6, %7 : vector<8x128xf32>
    %cst_5 = arith.constant 4.471500e-02 : f32
    %9 = vector.broadcast %cst_5 : f32 to vector<8x128xf32>
    %10 = arith.mulf %9, %8 : vector<8x128xf32>
    %11 = arith.addf %6, %10 : vector<8x128xf32>
    %cst_6 = arith.constant 0.797884583 : f32
    %12 = vector.broadcast %cst_6 : f32 to vector<8x128xf32>
    %13 = arith.mulf %12, %11 : vector<8x128xf32>
    %14 = math.tanh %13 : vector<8x128xf32>
    %cst_7 = arith.constant 1.000000e+00 : f32
    %15 = vector.broadcast %cst_7 : f32 to vector<8x128xf32>
    %16 = arith.addf %15, %14 : vector<8x128xf32>
    %cst_8 = arith.constant 5.000000e-01 : f32
    %17 = vector.broadcast %cst_8 : f32 to vector<8x128xf32>
    %18 = arith.mulf %17, %16 : vector<8x128xf32>
    %19 = arith.mulf %6, %18 : vector<8x128xf32>
    %c0_9 = arith.constant 0 : index
    %c0_10 = arith.constant 0 : index
    %20 = vector.load %arg4[%c0_9, %c0_10] : memref<128x128xbf16, #tpu.memory_space<vmem>>, vector<128x128xbf16>
    %c0_11 = arith.constant 0 : index
    %c0_12 = arith.constant 0 : index
    %21 = vector.load %arg5[%c0_11, %c0_12] : memref<1x128xf32, #tpu.memory_space<vmem>>, vector<1x128xf32>
    %22 = arith.truncf %19 : vector<8x128xf32> to vector<8x128xbf16>
    %cst_13 = arith.constant dense<0.000000e+00> : vector<8x128xf32>
    %23 = tpu.matmul %22, %20, %cst_13 {dimension_numbers = #tpu.dot_dimension_numbers<[1], [0], [0], [1], [0, 0, 1, 1], [], []>} : vector<8x128xbf16>, vector<128x128xbf16>, vector<8x128xf32> -> vector<8x128xf32>
    %24 = vector.broadcast %21 : vector<1x128xf32> to vector<8x128xf32>
    %25 = arith.addf %23, %24 : vector<8x128xf32>
    %cst_14 = arith.constant 0.000000e+00 : f32
    %26 = vector.broadcast %cst_14 : f32 to vector<8x128xf32>
    %27 = arith.cmpf ogt, %25, %26 : vector<8x128xf32>
    %cst_15 = arith.constant 1.000000e+00 : f32
    %28 = vector.broadcast %cst_15 : f32 to vector<8x128xf32>
    %29 = arith.addf %25, %28 : vector<8x128xf32>
    %30 = math.exp %25 : vector<8x128xf32>
    %31 = arith.select %27, %29, %30 : vector<8x128xi1>, vector<8x128xf32>
    %c0_16 = arith.constant 0 : index
    %c0_17 = arith.constant 0 : index
    %32 = vector.load %arg6[%c0_16, %c0_17] : memref<8x128xf32, #tpu.memory_space<vmem>>, vector<8x128xf32>
    tpu.vector_store %arg6[%c0_16, %c0_17], %31 {strides = array<i32>} : memref<8x128xf32, #tpu.memory_space<vmem>>, vector<8x128xf32>,
    return
  }
  func.func @transform_0(%arg0: i32) -> (i32, i32) {
    %c0_i32 = arith.constant 0 : i32
    %c0_i32_0 = arith.constant 0 : i32
    return %arg0, %c0_i32 : i32, i32
  }
  func.func @transform_1(%arg0: i32) -> (i32, i32) {
    %c0_i32 = arith.constant 0 : i32
    %c0_i32_0 = arith.constant 0 : i32
    %c0_i32_1 = arith.constant 0 : i32
    return %c0_i32, %c0_i32_0 : i32, i32
  }
  func.func @transform_2(%arg0: i32) -> (i32, i32) {
    %c0_i32 = arith.constant 0 : i32
    %c0_i32_0 = arith.constant 0 : i32
    %c0_i32_1 = arith.constant 0 : i32
    return %c0_i32, %c0_i32_0 : i32, i32
  }
  func.func @transform_3(%arg0: i32) -> (i32, i32) {
    %c0_i32 = arith.constant 0 : i32
    %c0_i32_0 = arith.constant 0 : i32
    %c0_i32_1 = arith.constant 0 : i32
    return %c0_i32, %c0_i32_0 : i32, i32
  }
  func.func @transform_4(%arg0: i32) -> (i32, i32) {
    %c0_i32 = arith.constant 0 : i32
    %c0_i32_0 = arith.constant 0 : i32
    %c0_i32_1 = arith.constant 0 : i32
    return %c0_i32, %c0_i32_0 : i32, i32
  }
  func.func @transform_5(%arg0: i32) -> (i32, i32) {
    %c0_i32 = arith.constant 0 : i32
    %c0_i32_0 = arith.constant 0 : i32
    return %arg0, %c0_i32 : i32, i32
  }
}

</mosaic_0001>

<llo_original>
// kernel: tpu_custom_call.1
$region0: #{tpu_custom_call.1}
  #allocation0 [shape = 'u32[]', space=smem, size = 0x4, offset = 0x4, fixed_abs, tag = 'smem constant byte address 0x4 - core index']
  #allocation1 [shape = 'u32[144,128]{1,0:T(1,128)}', space=vmem, size = 0x12000, scoped, tag = 'internal scratch']
  %s0 = inlined_call_operand.hbm [shape: f32[8,64], index: 0, kind: input, shape index: {}]
  %s1 = inlined_call_operand.hbm [shape: bf16[64,128], index: 1, kind: input, shape index: {}]
  %s2 = inlined_call_operand.vmem [shape: f32[1,128], index: 2, kind: input, shape index: {}]
  %s3 = inlined_call_operand.hbm [shape: bf16[128,128], index: 3, kind: input, shape index: {}]
  %s4 = inlined_call_operand.vmem [shape: f32[1,128], index: 4, kind: input, shape index: {}]
  %s5 = inlined_call_operand.hbm [shape: f32[8,128], index: 5, kind: output, shape index: {}]
  %s6 = sld [smem:[#allocation0]]
  $region42: #{tpu_custom_call.1} parent=0
    _
  %s8 = ssub.s32 1, %s6
  %s9 = scalar_select 0, %s8, %s6
  $region1: #{tpu_custom_call.1} parent=0
    #allocation2 [shape = 'u8[4096]{0}', space=vmem, size = 0x1000, scoped, tag = 'input window, operand 0, single buffered']
    #allocation3 [shape = 's32[1]{0}', space=sflag, size = 0x4, scoped, tag = 'scoped memory for tpu_custom_call.1']
    #allocation4 [shape = 's32[1]{0}', space=sflag, size = 0x4, scoped, tag = 'scoped memory for tpu_custom_call.1']
    #allocation5 [shape = 'u8[16384]{0}', space=vmem, size = 0x4000, scoped, tag = 'input window, operand 1, single buffered']
    #allocation6 [shape = 's32[1]{0}', space=sflag, size = 0x4, scoped, tag = 'scoped memory for tpu_custom_call.1']
    #allocation7 [shape = 'u8[32768]{0}', space=vmem, size = 0x8000, scoped, tag = 'input window, operand 3, single buffered']
    #allocation8 [shape = 'u8[4096]{0}', space=vmem, size = 0x1000, scoped, tag = 'output window, operand 0, single buffered']
    %10 = vsyncpa [#allocation3], 0
    %11 = vsyncpa [#allocation6], 0
    %12 = vsyncpa [#allocation4], 0
    // Predicated region
    $region2: #{tpu_custom_call.1} parent=1 // pred_check
      _
    $region3: #{tpu_custom_call.1} parent=1 // pred_check_branch
      %14 = sbr.rel (0) target = $region5
    $region4: #{tpu_custom_call.1} parent=1 // pred_region
      %s16 = ssub.s32 128, 128
      %17 = vsyncadd [#allocation3], %s16
      %s19 = sshll.u32 [#allocation2], 4
      %s20 = int_to_ptr.vmem [resolvable:$true] %s19
      %22 = dma.hbm_to_vmem [thread:$0]  %s0, 128, %s20, [#allocation3]
    $region5: #{tpu_custom_call.1} parent=1 // pred_fallthru
      _
    // Predicated region
    $region6: #{tpu_custom_call.1} parent=1 // pred_check
      _
    $region7: #{tpu_custom_call.1} parent=1 // pred_check_branch
      %24 = sbr.rel (0) target = $region9
    $region8: #{tpu_custom_call.1} parent=1 // pred_region
      %s26 = ssub.s32 512, 512
      %27 = vsyncadd [#allocation6], %s26
      %s28 = sshll.u32 [#allocation5], 4
      %s29 = int_to_ptr.vmem [resolvable:$true] %s28
      %34 = dma.hbm_to_vmem [thread:$0]  %s1, 512, %s29, [#allocation6], 64, 64, 4
    $region9: #{tpu_custom_call.1} parent=1 // pred_fallthru
      _
    // Predicated region
    $region10: #{tpu_custom_call.1} parent=1 // pred_check
      _
    $region11: #{tpu_custom_call.1} parent=1 // pred_check_branch
      %36 = sbr.rel (0) target = $region13
    $region12: #{tpu_custom_call.1} parent=1 // pred_region
      _
    $region13: #{tpu_custom_call.1} parent=1 // pred_fallthru
      _
    // Predicated region
    $region14: #{tpu_custom_call.1} parent=1 // pred_check
      _
    $region15: #{tpu_custom_call.1} parent=1 // pred_check_branch
      %38 = sbr.rel (0) target = $region17
    $region16: #{tpu_custom_call.1} parent=1 // pred_region
      %s40 = ssub.s32 1024, 1024
      %41 = vsyncadd [#allocation6], %s40
      %s42 = sshll.u32 [#allocation7], 4
      %s43 = int_to_ptr.vmem [resolvable:$true] %s42
      %48 = dma.hbm_to_vmem [thread:$0]  %s3, 1024, %s43, [#allocation6], 64, 64, 4
    $region17: #{tpu_custom_call.1} parent=1 // pred_fallthru
      _
    // Predicated region
    $region18: #{tpu_custom_call.1} parent=1 // pred_check
      _
    $region19: #{tpu_custom_call.1} parent=1 // pred_check_branch
      %50 = sbr.rel (0) target = $region21
    $region20: #{tpu_custom_call.1} parent=1 // pred_region
      _
    $region21: #{tpu_custom_call.1} parent=1 // pred_fallthru
      _
    // Predicated region
    $region22: #{tpu_custom_call.1} parent=1 // pred_check
      _
    $region23: #{tpu_custom_call.1} parent=1 // pred_check_branch
      %52 = sbr.rel (0) target = $region25
    $region24: #{tpu_custom_call.1} parent=1 // pred_region
      %53 = dma.done [#allocation3], 128
    $region25: #{tpu_custom_call.1} parent=1 // pred_fallthru
      _
    // Predicated region
    $region26: #{tpu_custom_call.1} parent=1 // pred_check
      _
    $region27: #{tpu_custom_call.1} parent=1 // pred_check_branch
      %55 = sbr.rel (0) target = $region29
    $region28: #{tpu_custom_call.1} parent=1 // pred_region
      %56 = dma.done [#allocation6], 512
    $region29: #{tpu_custom_call.1} parent=1 // pred_fallthru
      _
    // Predicated region
    $region30: #{tpu_custom_call.1} parent=1 // pred_check
      _
    $region31: #{tpu_custom_call.1} parent=1 // pred_check_branch
      %58 = sbr.rel (0) target = $region33
    $region32: #{tpu_custom_call.1} parent=1 // pred_region
      %59 = dma.done [#allocation6], 1024
    $region33: #{tpu_custom_call.1} parent=1 // pred_fallthru
      _
    %v61 = vld [vmem:[#allocation2] sm:$0xff]
    %v62 = vld [vmem:[#allocation5] sm:$0xf]
    %v63 = vld [vmem:[#allocation5 + $0x4] sm:$0xf]
    %v64 = vld [vmem:[#allocation5 + $0x8] sm:$0xf]
    %v65 = vld [vmem:[#allocation5 + $0xc] sm:$0xf]
    %v66 = vld [vmem:[#allocation5 + $0x10] sm:$0xf]
    %v67 = vld [vmem:[#allocation5 + $0x14] sm:$0xf]
    %v68 = vld [vmem:[#allocation5 + $0x18] sm:$0xf]
    %v69 = vld [vmem:[#allocation5 + $0x1c] sm:$0xf]
    %v70 = vld [vmem:[%s2] sm:$0x1]
    %v71 = vpack.c.bf16 %v61, %v61
    %v73 = vlaneseq
    %v74 = vshrl.u32 %v73, 7
    %v75 = vsub.s32 0, %v74
    %v76 = vrot.slane %v70, %v75
    %v86 = vunpack.c.l.b16 %v62
    %v87 = vunpack.c.l.b16 %v63
    %v88 = vunpack.c.l.b16 %v64
    %v89 = vunpack.c.l.b16 %v65
    %v90 = vunpack.c.l.b16 %v66
    %v91 = vunpack.c.l.b16 %v67
    %v92 = vunpack.c.l.b16 %v68
    %v93 = vunpack.c.l.b16 %v69
    %v94 = vpack.c.b16 %v87, %v86
    %v95 = vpack.c.b16 %v89, %v88
    %v96 = vpack.c.b16 %v91, %v90
    %v97 = vpack.c.b16 %v93, %v92
    %vm102 = vcmask 523264
    %v104 = vsel %vm102, %v71, 0
    %106 = vmatprep.subr.bf16.mxu0 0
    %107 = vmatpush1.bf16.msra.mxu0 %v94
    %108 = vmatprep.subr.bf16.mxu0 0
    %109 = vmatpush1.bf16.msra.mxu0 %v95
    %110 = vmatprep.subr.bf16.mxu0 0
    %111 = vmatpush1.bf16.msra.mxu0 %v96
    %112 = vmatprep.subr.bf16.mxu0 0
    %113 = vmatpush1.bf16.msra.mxu0 %v97
    %114 = vmatprep.subr.bf16.mxu0 0
    %115 = vmatpush1.bf16.msra.mxu0 0
    %116 = vmatprep.subr.bf16.mxu0 0
    %117 = vmatpush1.bf16.msra.mxu0 0
    %118 = vmatprep.subr.bf16.mxu0 0
    %119 = vmatpush1.bf16.msra.mxu0 0
    %120 = vmatprep.subr.bf16.mxu0 0
    %121 = vmatpush1.bf16.msra.mxu0 0
    %122 = vmatprep.subr.bf16.mxu0 0
    %123 = vmatpush1.bf16.msra.mxu0 0
    %124 = vmatprep.subr.bf16.mxu0 0
    %125 = vmatpush1.bf16.msra.mxu0 0
    %126 = vmatprep.subr.bf16.mxu0 0
    %127 = vmatpush1.bf16.msra.mxu0 0
    %128 = vmatprep.subr.bf16.mxu0 0
    %129 = vmatpush1.bf16.msra.mxu0 0
    %130 = vmatprep.subr.bf16.mxu0 0
    %131 = vmatpush1.bf16.msra.mxu0 0
    %132 = vmatprep.subr.bf16.mxu0 0
    %133 = vmatpush1.bf16.msra.mxu0 0
    %134 = vmatprep.subr.bf16.mxu0 0
    %135 = vmatpush1.bf16.msra.mxu0 0
    %136 = vmatprep.subr.bf16.mxu0 0
    %137 = vmatpush1.bf16.msra.mxu0 0
    %138 = vmatprep.mubr.bf16.mxu0 0
    %139 = vmatmul.mubr.bf16.gmra.mrb[0].mxu0 %v104
    %v140 = vpop.f32.mrb[0].mxu0
    %v141 = vadd.f32 %v76, %v140
    %v142 = vpop.f32.mrb[0].mxu0
    %v143 = vpop.f32.mrb[0].mxu0
    %v144 = vpop.f32.mrb[0].mxu0
    %145 = vdwg.mxu0
    %v146 = vmul.f32 %v141, %v141
    %v147 = vmul.f32 %v141, %v146
    %v148 = vmul.f32 %v147, 0.044715
    %v149 = vadd.f32 %v141, %v148
    %v150 = vmul.f32 %v149, 0.7978846
    %v151 = vtanh.pop %v150
    %v152 = vadd.f32 %v151, 1.0
    %v153 = vmul.f32 %v152, 0.5
    %v154 = vmul.f32 %v141, %v153
    %v155 = vld [vmem:[#allocation7] sm:$0xf]
    %v156 = vld [vmem:[#allocation7 + $0x4] sm:$0xf]
    %v157 = vld [vmem:[#allocation7 + $0x8] sm:$0xf]
    %v158 = vld [vmem:[#allocation7 + $0xc] sm:$0xf]
    %v159 = vld [vmem:[#allocation7 + $0x10] sm:$0xf]
    %v160 = vld [vmem:[#allocation7 + $0x14] sm:$0xf]
    %v161 = vld [vmem:[#allocation7 + $0x18] sm:$0xf]
    %v162 = vld [vmem:[#allocation7 + $0x1c] sm:$0xf]
    %v163 = vld [vmem:[#allocation7 + $0x20] sm:$0xf]
    %v164 = vld [vmem:[#allocation7 + $0x24] sm:$0xf]
    %v165 = vld [vmem:[#allocation7 + $0x28] sm:$0xf]
    %v166 = vld [vmem:[#allocation7 + $0x2c] sm:$0xf]
    %v167 = vld [vmem:[#allocation7 + $0x30] sm:$0xf]
    %v168 = vld [vmem:[#allocation7 + $0x34] sm:$0xf]
    %v169 = vld [vmem:[#allocation7 + $0x38] sm:$0xf]
    %v170 = vld [vmem:[#allocation7 + $0x3c] sm:$0xf]
    %v171 = vld [vmem:[%s4] sm:$0x1]
    %v172 = vpack.c.bf16 %v154, %v154
    %v174 = vlaneseq
    %v175 = vshrl.u32 %v174, 7
    %v176 = vsub.s32 0, %v175
    %v177 = vrot.slane %v171, %v176
    %v195 = vunpack.c.l.b16 %v155
    %v196 = vunpack.c.l.b16 %v156
    %v197 = vunpack.c.l.b16 %v157
    %v198 = vunpack.c.l.b16 %v158
    %v199 = vunpack.c.l.b16 %v159
    %v200 = vunpack.c.l.b16 %v160
    %v201 = vunpack.c.l.b16 %v161
    %v202 = vunpack.c.l.b16 %v162
    %v203 = vunpack.c.l.b16 %v163
    %v204 = vunpack.c.l.b16 %v164
    %v205 = vunpack.c.l.b16 %v165
    %v206 = vunpack.c.l.b16 %v166
    %v207 = vunpack.c.l.b16 %v167
    %v208 = vunpack.c.l.b16 %v168
    %v209 = vunpack.c.l.b16 %v169
    %v210 = vunpack.c.l.b16 %v170
    %v211 = vpack.c.b16 %v196, %v195
    %v212 = vpack.c.b16 %v198, %v197
    %v213 = vpack.c.b16 %v200, %v199
    %v214 = vpack.c.b16 %v202, %v201
    %v215 = vpack.c.b16 %v204, %v203
    %v216 = vpack.c.b16 %v206, %v205
    %v217 = vpack.c.b16 %v208, %v207
    %v218 = vpack.c.b16 %v210, %v209
    %227 = vmatprep.subr.bf16.mxu0 0
    %228 = vmatpush1.bf16.msra.mxu0 %v211
    %229 = vmatprep.subr.bf16.mxu0 0
    %230 = vmatpush1.bf16.msra.mxu0 %v212
    %231 = vmatprep.subr.bf16.mxu0 0
    %232 = vmatpush1.bf16.msra.mxu0 %v213
    %233 = vmatprep.subr.bf16.mxu0 0
    %234 = vmatpush1.bf16.msra.mxu0 %v214
    %235 = vmatprep.subr.bf16.mxu0 0
    %236 = vmatpush1.bf16.msra.mxu0 %v215
    %237 = vmatprep.subr.bf16.mxu0 0
    %238 = vmatpush1.bf16.msra.mxu0 %v216
    %239 = vmatprep.subr.bf16.mxu0 0
    %240 = vmatpush1.bf16.msra.mxu0 %v217
    %241 = vmatprep.subr.bf16.mxu0 0
    %242 = vmatpush1.bf16.msra.mxu0 %v218
    %243 = vmatprep.subr.bf16.mxu0 0
    %244 = vmatpush1.bf16.msra.mxu0 0
    %245 = vmatprep.subr.bf16.mxu0 0
    %246 = vmatpush1.bf16.msra.mxu0 0
    %247 = vmatprep.subr.bf16.mxu0 0
    %248 = vmatpush1.bf16.msra.mxu0 0
    %249 = vmatprep.subr.bf16.mxu0 0
    %250 = vmatpush1.bf16.msra.mxu0 0
    %251 = vmatprep.subr.bf16.mxu0 0
    %252 = vmatpush1.bf16.msra.mxu0 0
    %253 = vmatprep.subr.bf16.mxu0 0
    %254 = vmatpush1.bf16.msra.mxu0 0
    %255 = vmatprep.subr.bf16.mxu0 0
    %256 = vmatpush1.bf16.msra.mxu0 0
    %257 = vmatprep.subr.bf16.mxu0 0
    %258 = vmatpush1.bf16.msra.mxu0 0
    %259 = vmatprep.mubr.bf16.mxu0 0
    %260 = vmatmul.mubr.bf16.gmra.mrb[0].mxu0 %v172
    %v261 = vpop.f32.mrb[0].mxu0
    %v262 = vadd.f32 %v177, %v261
    %v263 = vpop.f32.mrb[0].mxu0
    %v264 = vpop.f32.mrb[0].mxu0
    %v265 = vpop.f32.mrb[0].mxu0
    %266 = vdwg.mxu0
    %vm267 = vcmp.gt.f32.partialorder %v262, 0.0
    %v268 = vadd.f32 %v262, 1.0
    %v269 = vmul.f32 %v262, 1.442695
    %v270 = vpow.pop %v269
    %v271 = vsel %vm267, %v268, %v270
    %272 = vst [vmem:[#allocation8] sm:$0xff] %v271
    // Predicated region
    $region34: #{tpu_custom_call.1} parent=1 // pred_check
      _
    $region35: #{tpu_custom_call.1} parent=1 // pred_check_branch
      %274 = sbr.rel (0) target = $region37
    $region36: #{tpu_custom_call.1} parent=1 // pred_region
      %s276 = ssub.s32 128, 128
      %277 = vsyncadd [#allocation4], %s276
      %s279 = sshll.u32 [#allocation8], 4
      %s280 = int_to_ptr.vmem [resolvable:$true] %s279
      %282 = dma.vmem_to_hbm [thread:$0]  %s280, 128, %s5, [#allocation4]
    $region37: #{tpu_custom_call.1} parent=1 // pred_fallthru
      _
    // Predicated region
    $region38: #{tpu_custom_call.1} parent=1 // pred_check
      _
    $region39: #{tpu_custom_call.1} parent=1 // pred_check_branch
      %284 = sbr.rel (0) target = $region41
    $region40: #{tpu_custom_call.1} parent=1 // pred_region
      %285 = dma.done [#allocation4], 128
    $region41: #{tpu_custom_call.1} parent=1 // pred_fallthru
      _
    %286 = vsyncpa [#allocation3], 1
    %287 = vsyncpa [#allocation6], 1
    %288 = vsyncpa [#allocation4], 1

</llo_original>
